<compile_context>
chip_gen: v6e
topology: v6e:2x2x1
jax: 0.10.0
libtpu: 0.0.40
codegen_flags: <defaults>
</compile_context>

<pallas_src>
import math
from functools import partial

import jax
import jax.numpy as jnp
from jax.experimental import pallas as pl
from jax.experimental.pallas import tpu as pltpu


def _round_up(x, m):
    return ((x + m - 1) // m) * m


# --------------------------------------------------------------------------- #
# Kernel
# --------------------------------------------------------------------------- #
def _linear_kernel(x_ref, wt_ref, b_ref, o_ref, *, std_init, out_dim):
    # x_ref: (TM, K)   wt_ref: (K, Np)   b_ref: (1, out_dim)   o_ref: (TM, out_dim)
    acc = jnp.dot(x_ref[...], wt_ref[...], preferred_element_type=jnp.float32)
    if acc.shape[-1] != out_dim:           # drop zero-padded MXU columns (static)
        acc = acc[:, :out_dim]
    if std_init != 1.0:                    # trace-time fold
        acc = acc * std_init
    o_ref[...] = (acc + b_ref[...].astype(jnp.float32)).astype(o_ref.dtype)


# --------------------------------------------------------------------------- #
# Generation-aware sizing helpers
# --------------------------------------------------------------------------- #
def _tpu_caps():
    """Return (vmem_capacity_bytes, dual_tensorcore) with safe fallbacks."""
    vmem = 128 << 20
    try:
        info = pltpu.get_tpu_info()
        vmem = int(getattr(info, "vmem_capacity_bytes", vmem))
    except Exception:
        pass
    # v7x has 64 MiB VMEM per TensorCore and 2 TCs/chip; v5e/v6e have 128 MiB, 1 TC.
    dual_tc = vmem <= (64 << 20)
    return vmem, dual_tc


def _pick_tm(M, K, Np, N, in_item, out_item, vmem_bytes, dual_tc, tm_max=4096):
    """Largest row tile whose working set fits the generation-aware VMEM budget.

    Per-step bytes: 2*tm*K (x, dbuf) + 2*tm*N (out, dbuf) + tm*Np*4 (f32 acc)
                    + 2*Np*K (resident weight, dbuf alloc) + 2*N*4 (bias).
    Budget: ~half of per-core VMEM minus headroom (v7x ~24 MiB, v5e/v6e ~48 MiB).
    """
    budget = max(min(vmem_bytes // 2 - (8 << 20), 48 << 20), 8 << 20)

    tm = min(tm_max, _round_up(max(M, 1), 8))
    if dual_tc and M >= 256:
        # dual-TC: aim for >= 2 grid steps per core so prefetch/writeback overlap
        tm = min(tm, _round_up(pl.cdiv(M, 4), 128))
    if tm >= 128:
        tm -= tm % 128                                  # MXU-row aligned

    fixed = 2 * Np * K * in_item + 2 * N * 4
    per_row = 2 * K * in_item + 2 * N * out_item + Np * 4
    while tm > 8 and fixed + tm * per_row > budget:
        tm //= 2
        tm -= tm % (128 if tm >= 128 else 8)
    tm = max(8, tm)

    if dual_tc:
        # keep the M grid balanced across the two TensorCores (even step count)
        gm = pl.cdiv(M, tm)
        if gm > 1 and gm % 2 == 1:
            tm = max(8, _round_up(pl.cdiv(M, gm + 1), 8))
    return tm


# --------------------------------------------------------------------------- #
# Wrapper
# --------------------------------------------------------------------------- #
def linear_layer(x, weight, bias, *, std_init=1.0, bias_init=0.0, tm=None,
                 compute_dtype=None):
    """out = std_init * (x @ weight.T + bias) + bias_init

    x: (..., in_dim); weight: (out_dim, in_dim); bias: (out_dim,).
    compute_dtype: optional (e.g. jnp.bfloat16) matmul-input dtype; accumulation
    and the affine epilogue stay f32, output dtype matches x.
    """
    in_dim = x.shape[-1]
    out_dim = weight.shape[0]
    lead_shape = x.shape[:-1]
    out_dtype = x.dtype

    x2 = x.reshape(-1, in_dim)
    M = x2.shape[0]
    if compute_dtype is not None:
        x2 = x2.astype(compute_dtype)
        weight = weight.astype(compute_dtype)

    # One-time wrapper-side transpose -> canonical (K, N) MXU feed; pad N up to a
    # lane-dense multiple of 128 with zeros (tiny; padded columns dropped in-kernel).
    wt = weight.T                                        # (in_dim, out_dim)
    Np = _round_up(out_dim, 128)
    if Np != out_dim:
        wt = jnp.pad(wt, ((0, 0), (0, Np - out_dim)))

    # Fold the affine into the bias once (f32 epilogue in-kernel), unpadded.
    b2 = (float(std_init) * bias.astype(jnp.float32) + float(bias_init))
    b2 = b2.reshape(1, out_dim)

    in_item = jnp.dtype(x2.dtype).itemsize
    out_item = jnp.dtype(out_dtype).itemsize
    sub = max(8, 32 // in_item)            # sublane packing: 8 f32 / 16 bf16 / 32 int8

    vmem_bytes, dual_tc = _tpu_caps()
    if tm is None:
        tm = _pick_tm(M, in_dim, Np, out_dim, in_item, out_item, vmem_bytes, dual_tc)
    tm = _round_up(max(int(tm), sub), sub)

    grid_m = pl.cdiv(M, tm)                # ragged last block: OOB rows independent,
                                           # OOB writes dropped

    kernel = partial(_linear_kernel, std_init=float(std_init), out_dim=out_dim)

    cost = pl.CostEstimate(
        flops=2 * M * in_dim * Np,
        transcendentals=0,
        bytes_accessed=(M * in_dim * in_item + in_dim * Np * in_item
                        + out_dim * 4 + M * out_dim * out_item),
    )

    out = pl.pallas_call(
        kernel,
        out_shape=jax.ShapeDtypeStruct((M, out_dim), out_dtype),
        grid_spec=pltpu.PrefetchScalarGridSpec(
            num_scalar_prefetch=0,
            grid=(grid_m,),
            in_specs=[
                pl.BlockSpec((tm, in_dim), lambda i: (i, 0)),    # x row tile
                pl.BlockSpec((in_dim, Np), lambda i: (0, 0)),    # W.T, resident
                pl.BlockSpec((1, out_dim), lambda i: (0, 0)),    # folded bias
            ],
            out_specs=pl.BlockSpec((tm, out_dim), lambda i: (i, 0)),  # unpadded out
        ),
        compiler_params=pltpu.CompilerParams(
            dimension_semantics=("parallel",),
            vmem_limit_bytes=(40 << 20) if dual_tc else (64 << 20),
        ),
        cost_estimate=cost,
    )(x2, wt, b2)

    return out.reshape(*lead_shape, out_dim)


# --------------------------------------------------------------------------- #
# Parameter init (deterministic re-implementation of LinearLayer.__init__)
# --------------------------------------------------------------------------- #
def init_linear_params(key, in_dim, out_dim, *, is_first=False, freq_init=False,
                       dtype=jnp.float32):
    kw, kb = jax.random.split(key)
    if is_first:
        weight = jax.random.uniform(kw, (out_dim, in_dim), dtype,
                                    minval=-1.0 / in_dim, maxval=1.0 / in_dim)
    elif freq_init:
        lim = math.sqrt(6.0 / in_dim) / 25.0
        weight = jax.random.uniform(kw, (out_dim, in_dim), dtype,
                                    minval=-lim, maxval=lim)
    else:
        # 0.25 * kaiming_normal_(a=0.2, mode='fan_in', nonlinearity='leaky_relu')
        gain = math.sqrt(2.0 / (1.0 + 0.2 ** 2))
        std = gain / math.sqrt(in_dim)
        weight = 0.25 * std * jax.random.normal(kw, (out_dim, in_dim), dtype)
    blim = math.sqrt(1.0 / in_dim)
    bias = jax.random.uniform(kb, (out_dim,), dtype, minval=-blim, maxval=blim)
    return weight, bias


if __name__ == "__main__":
    key = jax.random.PRNGKey(0)
    k_x, k_p, k_x2 = jax.random.split(key, 3)

    # --- primary example (module defaults: std_init=1, bias_init=0) ---------
    batch, seq, in_dim, out_dim = 2, 8, 32, 64
    x = jax.random.normal(k_x, (batch, seq, in_dim), jnp.float32)
    weight, bias = init_linear_params(k_p, in_dim, out_dim)

    out = linear_layer(x, weight, bias)
    out = jax.block_until_ready(out)
    ref = 1.0 * (x @ weight.T + bias) + 0.0
    assert out.shape == (batch, seq, out_dim)
    assert jnp.allclose(out, ref, atol=1e-4, rtol=1e-4)

    # --- ragged-M + non-default affine (exercises ragged block & epilogue) --
    x_r = jax.random.normal(k_x2, (3, 5, in_dim), jnp.float32)   # M = 15
    out_r = linear_layer(x_r, weight, bias, std_init=0.5, bias_init=0.3)
    out_r = jax.block_until_ready(out_r)
    ref_r = 0.5 * (x_r @ weight.T + bias) + 0.3
    assert out_r.shape == (3, 5, out_dim)
    assert jnp.allclose(out_r, ref_r, atol=1e-4, rtol=1e-4)

    # --- optional bf16 I/O path (f32 accumulation + f32 epilogue) -----------
    out_bf = linear_layer(x, weight, bias, compute_dtype=jnp.bfloat16)
    out_bf = jax.block_until_ready(out_bf)
    x_bf = x.astype(jnp.bfloat16).astype(jnp.float32)
    w_bf = weight.astype(jnp.bfloat16).astype(jnp.float32)
    ref_bf = 1.0 * (x_bf @ w_bf.T + bias) + 0.0
    assert out_bf.shape == (batch, seq, out_dim)
    assert jnp.allclose(out_bf, ref_bf, atol=1e-2, rtol=1e-2)

    print("KERNEL_OK")
</pallas_src>

<mosaic_0001>
module attributes {stable_mosaic.version = 11 : i64} {
  func.func @_linear_kernel(%arg0: i32, %arg1: memref<16x32xf32, #tpu.memory_space<vmem>>, %arg2: memref<32x128xf32, #tpu.memory_space<vmem>>, %arg3: memref<1x64xf32, #tpu.memory_space<vmem>>, %arg4: memref<16x64xf32, #tpu.memory_space<vmem>>) attributes {dimension_semantics = [#tpu.dimension_semantics<parallel>], iteration_bounds = array<i64: 1>, scalar_prefetch = 0 : i64, scratch_operands = 0 : i64, tpu.core_type = #tpu.core_type<tc>, window_params = [{transform_indices = @transform_0, window_bounds = array<i64: 16, 32>}, {pipeline_mode = #tpu.pipeline_mode<synchronous>, transform_indices = @transform_1, window_bounds = array<i64: 32, 128>}, {pipeline_mode = #tpu.pipeline_mode<synchronous>, transform_indices = @transform_2, window_bounds = array<i64: 1, 64>}, {transform_indices = @transform_3, window_bounds = array<i64: 16, 64>}]} {
    %c0 = arith.constant 0 : index
    %c0_0 = arith.constant 0 : index
    %0 = vector.load %arg1[%c0, %c0_0] : memref<16x32xf32, #tpu.memory_space<vmem>>, vector<16x32xf32>
    %c0_1 = arith.constant 0 : index
    %c0_2 = arith.constant 0 : index
    %1 = vector.load %arg2[%c0_1, %c0_2] : memref<32x128xf32, #tpu.memory_space<vmem>>, vector<32x128xf32>
    %cst = arith.constant dense<0.000000e+00> : vector<16x128xf32>
    %2 = tpu.matmul %0, %1, %cst {dimension_numbers = #tpu.dot_dimension_numbers<[1], [0], [0], [1], [0, 0, 1, 1], [], []>} : vector<16x32xf32>, vector<32x128xf32>, vector<16x128xf32> -> vector<16x128xf32>
    %3 = vector.extract_strided_slice %2 {offsets = [0, 0], sizes = [16, 64], strides = [1, 1]} : vector<16x128xf32> to vector<16x64xf32>
    %c0_3 = arith.constant 0 : index
    %c0_4 = arith.constant 0 : index
    %4 = vector.load %arg3[%c0_3, %c0_4] : memref<1x64xf32, #tpu.memory_space<vmem>>, vector<1x64xf32>
    %5 = vector.broadcast %4 : vector<1x64xf32> to vector<16x64xf32>
    %6 = arith.addf %3, %5 : vector<16x64xf32>
    %c0_5 = arith.constant 0 : index
    %c0_6 = arith.constant 0 : index
    %7 = vector.load %arg4[%c0_5, %c0_6] : memref<16x64xf32, #tpu.memory_space<vmem>>, vector<16x64xf32>
    tpu.vector_store %arg4[%c0_5, %c0_6], %6 {strides = array<i32>} : memref<16x64xf32, #tpu.memory_space<vmem>>, vector<16x64xf32>,
    return
  }
  func.func @transform_0(%arg0: i32) -> (i32, i32) {
    %c0_i32 = arith.constant 0 : i32
    %c0_i32_0 = arith.constant 0 : i32
    return %arg0, %c0_i32 : i32, i32
  }
  func.func @transform_1(%arg0: i32) -> (i32, i32) {
    %c0_i32 = arith.constant 0 : i32
    %c0_i32_0 = arith.constant 0 : i32
    %c0_i32_1 = arith.constant 0 : i32
    return %c0_i32, %c0_i32_0 : i32, i32
  }
  func.func @transform_2(%arg0: i32) -> (i32, i32) {
    %c0_i32 = arith.constant 0 : i32
    %c0_i32_0 = arith.constant 0 : i32
    %c0_i32_1 = arith.constant 0 : i32
    return %c0_i32, %c0_i32_0 : i32, i32
  }
  func.func @transform_3(%arg0: i32) -> (i32, i32) {
    %c0_i32 = arith.constant 0 : i32
    %c0_i32_0 = arith.constant 0 : i32
    return %arg0, %c0_i32 : i32, i32
  }
}

</mosaic_0001>

<llo_original>
// kernel: tpu_custom_call.1
$region0: #{tpu_custom_call.1}
  #allocation0 [shape = 'u32[]', space=smem, size = 0x4, offset = 0x4, fixed_abs, tag = 'smem constant byte address 0x4 - core index']
  #allocation1 [shape = 'u32[144,128]{1,0:T(1,128)}', space=vmem, size = 0x12000, scoped, tag = 'internal scratch']
  %s0 = inlined_call_operand.hbm [shape: f32[16,32], index: 0, kind: input, shape index: {}]
  %s1 = inlined_call_operand.hbm [shape: f32[32,128], index: 1, kind: input, shape index: {}]
  %s2 = inlined_call_operand.vmem [shape: f32[1,64], index: 2, kind: input, shape index: {}]
  %s3 = inlined_call_operand.hbm [shape: f32[16,64], index: 3, kind: output, shape index: {}]
  %s4 = sld [smem:[#allocation0]]
  $region30: #{tpu_custom_call.1} parent=0
    _
  %s6 = ssub.s32 1, %s4
  %s7 = scalar_select 0, %s6, %s4
  $region1: #{tpu_custom_call.1} parent=0
    #allocation2 [shape = 'u8[8192]{0}', space=vmem, size = 0x2000, scoped, tag = 'input window, operand 0, single buffered']
    #allocation3 [shape = 's32[1]{0}', space=sflag, size = 0x4, scoped, tag = 'scoped memory for tpu_custom_call.1']
    #allocation4 [shape = 's32[1]{0}', space=sflag, size = 0x4, scoped, tag = 'scoped memory for tpu_custom_call.1']
    #allocation5 [shape = 'u8[16384]{0}', space=vmem, size = 0x4000, scoped, tag = 'input window, operand 1, single buffered']
    #allocation6 [shape = 's32[1]{0}', space=sflag, size = 0x4, scoped, tag = 'scoped memory for tpu_custom_call.1']
    #allocation7 [shape = 'u8[8192]{0}', space=vmem, size = 0x2000, scoped, tag = 'output window, operand 0, single buffered']
    %8 = vsyncpa [#allocation3], 0
    %9 = vsyncpa [#allocation6], 0
    %10 = vsyncpa [#allocation4], 0
    // Predicated region
    $region2: #{tpu_custom_call.1} parent=1 // pred_check
      _
    $region3: #{tpu_custom_call.1} parent=1 // pred_check_branch
      %12 = sbr.rel (0) target = $region5
    $region4: #{tpu_custom_call.1} parent=1 // pred_region
      %s14 = ssub.s32 256, 256
      %15 = vsyncadd [#allocation3], %s14
      %s16 = sshll.u32 [#allocation2], 4
      %s17 = int_to_ptr.vmem [resolvable:$true] %s16
      %22 = dma.hbm_to_vmem [thread:$0]  %s0, 256, %s17, [#allocation3], 128, 128, 8
    $region5: #{tpu_custom_call.1} parent=1 // pred_fallthru
      _
    // Predicated region
    $region6: #{tpu_custom_call.1} parent=1 // pred_check
      _
    $region7: #{tpu_custom_call.1} parent=1 // pred_check_branch
      %24 = sbr.rel (0) target = $region9
    $region8: #{tpu_custom_call.1} parent=1 // pred_region
      %s26 = ssub.s32 512, 512
      %27 = vsyncadd [#allocation6], %s26
      %s28 = sshll.u32 [#allocation5], 4
      %s29 = int_to_ptr.vmem [resolvable:$true] %s28
      %34 = dma.hbm_to_vmem [thread:$0]  %s1, 512, %s29, [#allocation6], 128, 128, 8
    $region9: #{tpu_custom_call.1} parent=1 // pred_fallthru
      _
    // Predicated region
    $region10: #{tpu_custom_call.1} parent=1 // pred_check
      _
    $region11: #{tpu_custom_call.1} parent=1 // pred_check_branch
      %36 = sbr.rel (0) target = $region13
    $region12: #{tpu_custom_call.1} parent=1 // pred_region
      _
    $region13: #{tpu_custom_call.1} parent=1 // pred_fallthru
      _
    // Predicated region
    $region14: #{tpu_custom_call.1} parent=1 // pred_check
      _
    $region15: #{tpu_custom_call.1} parent=1 // pred_check_branch
      %38 = sbr.rel (0) target = $region17
    $region16: #{tpu_custom_call.1} parent=1 // pred_region
      %39 = dma.done [#allocation3], 256
    $region17: #{tpu_custom_call.1} parent=1 // pred_fallthru
      _
    // Predicated region
    $region18: #{tpu_custom_call.1} parent=1 // pred_check
      _
    $region19: #{tpu_custom_call.1} parent=1 // pred_check_branch
      %41 = sbr.rel (0) target = $region21
    $region20: #{tpu_custom_call.1} parent=1 // pred_region
      %42 = dma.done [#allocation6], 512
    $region21: #{tpu_custom_call.1} parent=1 // pred_fallthru
      _
    %v43 = vld [vmem:[#allocation2] sm:$0xff]
    %v44 = vld [vmem:[#allocation2 + $0x8] sm:$0xff]
    %v45 = vld [vmem:[#allocation5] sm:$0xff]
    %v46 = vld [vmem:[#allocation5 + $0x8] sm:$0xff]
    %v47 = vld [vmem:[#allocation5 + $0x10] sm:$0xff]
    %v48 = vld [vmem:[#allocation5 + $0x18] sm:$0xff]
    %vm49 = vcmask 261120
    %v51 = vsel %vm49, %v43, 0
    %v54 = vsel %vm49, %v44, 0
    %56 = vmatprep.subr.mxu0 0.0
    %57 = vmatpush1.msra.mxu0 0.0
    %58 = vmatprep.subr.mxu0 0.0
    %59 = vmatpush1.msra.mxu0 0.0
    %60 = vmatprep.subr.mxu0 0.0
    %61 = vmatpush1.msra.mxu0 0.0
    %62 = vmatprep.subr.mxu0 0.0
    %63 = vmatpush1.msra.mxu0 0.0
    %64 = vmatprep.subr.mxu0 0.0
    %65 = vmatpush1.msra.mxu0 0.0
    %66 = vmatprep.subr.mxu0 0.0
    %67 = vmatpush1.msra.mxu0 0.0
    %68 = vmatprep.subr.mxu0 0.0
    %69 = vmatpush1.msra.mxu0 0.0
    %70 = vmatprep.subr.mxu0 0.0
    %71 = vmatpush1.msra.mxu0 0.0
    %72 = vmatprep.subr.mxu0 0.0
    %73 = vmatpush1.msra.mxu0 0.0
    %74 = vmatprep.subr.mxu0 0.0
    %75 = vmatpush1.msra.mxu0 0.0
    %76 = vmatprep.subr.mxu0 0.0
    %77 = vmatpush1.msra.mxu0 0.0
    %78 = vmatprep.subr.mxu0 0.0
    %79 = vmatpush1.msra.mxu0 0.0
    %80 = vmatprep.subr.mxu0 0.0
    %81 = vmatpush1.msra.mxu0 %v48
    %82 = vmatprep.subr.mxu0 0.0
    %83 = vmatpush1.msra.mxu0 %v47
    %84 = vmatprep.subr.mxu0 0.0
    %85 = vmatpush1.msra.mxu0 %v46
    %86 = vmatprep.subr.mxu0 0.0
    %87 = vmatpush1.msra.mxu0 %v45
    %88 = vmatprep.subr.mxu0 0.0
    %89 = vmatpush2.msra.mxu0 0.0
    %90 = vmatprep.subr.mxu0 0.0
    %91 = vmatpush2.msra.mxu0 0.0
    %92 = vmatprep.subr.mxu0 0.0
    %93 = vmatpush2.msra.mxu0 0.0
    %94 = vmatprep.subr.mxu0 0.0
    %95 = vmatpush2.msra.mxu0 0.0
    %96 = vmatprep.subr.mxu0 0.0
    %97 = vmatpush2.msra.mxu0 0.0
    %98 = vmatprep.subr.mxu0 0.0
    %99 = vmatpush2.msra.mxu0 0.0
    %100 = vmatprep.subr.mxu0 0.0
    %101 = vmatpush2.msra.mxu0 0.0
    %102 = vmatprep.subr.mxu0 0.0
    %103 = vmatpush2.msra.mxu0 0.0
    %104 = vmatprep.subr.mxu0 0.0
    %105 = vmatpush2.msra.mxu0 0.0
    %106 = vmatprep.subr.mxu0 0.0
    %107 = vmatpush2.msra.mxu0 0.0
    %108 = vmatprep.subr.mxu0 0.0
    %109 = vmatpush2.msra.mxu0 0.0
    %110 = vmatprep.subr.mxu0 0.0
    %111 = vmatpush2.msra.mxu0 0.0
    %112 = vmatprep.subr.mxu0 0.0
    %113 = vmatpush2.msra.mxu0 0.0
    %114 = vmatprep.subr.mxu0 0.0
    %115 = vmatpush2.msra.mxu0 0.0
    %116 = vmatprep.subr.mxu0 0.0
    %117 = vmatpush2.msra.mxu0 0.0
    %118 = vmatprep.subr.mxu0 0.0
    %119 = vmatpush2.msra.mxu0 0.0
    %120 = vmatprep.mubr.f32.mxu0 0.0
    %121 = vmatmul.mubr.f32.gmra.mxu0 %v51
    %v122 = vpop.f32.mrf.mxu0
    %v123 = vadd.f32 0.0, %v122
    %v124 = vpop.f32.mrf.mxu0
    %125 = vmatprep.mubr.f32.mxu0 0.0
    %126 = vmatmul.mubr.f32.gmra.mxu0 %v54
    %v127 = vpop.f32.mrf.mxu0
    %v128 = vadd.f32 0.0, %v127
    %v129 = vpop.f32.mrf.mxu0
    %130 = vdwg.mxu0
    %v131 = vld [vmem:[%s2] sm:$0x1]
    %v133 = vlaneseq
    %v134 = vshrl.u32 %v133, 7
    %v135 = vsub.s32 0, %v134
    %v136 = vrot.slane %v131, %v135
    %v138 = vadd.f32 %v123, %v136
    %v139 = vadd.f32 %v128, %v136
    %vm140 = vcmask 523264
    %141 = vst.msk [vmem:[#allocation7] sm:$0xff] %vm140, %v138
    %142 = vst.msk [vmem:[#allocation7 + $0x8] sm:$0xff] %vm140, %v139
    // Predicated region
    $region22: #{tpu_custom_call.1} parent=1 // pred_check
      _
    $region23: #{tpu_custom_call.1} parent=1 // pred_check_branch
      %144 = sbr.rel (0) target = $region25
    $region24: #{tpu_custom_call.1} parent=1 // pred_region
      %s146 = ssub.s32 256, 256
      %147 = vsyncadd [#allocation4], %s146
      %s148 = sshll.u32 [#allocation7], 4
      %s149 = int_to_ptr.vmem [resolvable:$true] %s148
      %154 = dma.vmem_to_hbm [thread:$0]  %s149, 256, %s3, [#allocation4], 128, 128, 8
    $region25: #{tpu_custom_call.1} parent=1 // pred_fallthru
      _
    // Predicated region
    $region26: #{tpu_custom_call.1} parent=1 // pred_check
      _
    $region27: #{tpu_custom_call.1} parent=1 // pred_check_branch
      %156 = sbr.rel (0) target = $region29
    $region28: #{tpu_custom_call.1} parent=1 // pred_region
      %157 = dma.done [#allocation4], 256
    $region29: #{tpu_custom_call.1} parent=1 // pred_fallthru
      _
    %158 = vsyncpa [#allocation3], 1
    %159 = vsyncpa [#allocation6], 1
    %160 = vsyncpa [#allocation4], 1

</llo_original>
